<compile_context>
chip_gen: v6e
topology: v6e:2x2x1
jax: 0.10.0
libtpu: 0.0.40
codegen_flags: <defaults>
</compile_context>

<pallas_src>
import functools
import math

import jax
import jax.numpy as jnp
from jax.experimental import pallas as pl
from jax.experimental.pallas import tpu as pltpu


# --------------------------------------------------------------------------- #
# Kernels
# --------------------------------------------------------------------------- #
def _proj_kernel(x_ref, w_ref, b_ref, o_ref, *, compute_dtype):
    # x_ref: (tm, D)   w_ref: (tn, D)   b_ref: (1, tn)   o_ref: (tm, tn)
    x = x_ref[...]
    w = w_ref[...]
    if compute_dtype is not None:
        x = x.astype(compute_dtype)
        w = w.astype(compute_dtype)
    # NT contraction (contract the last dim of both operands).  The MXU
    # consumes the (tn, D) RHS in this layout natively.
    # TODO(synk): confirm via pl.lower_as_mlir that no vxpose is emitted for
    # the weight operand on the target generation.
    acc = jax.lax.dot_general(
        x, w,
        dimension_numbers=(((1,), (1,)), ((), ())),
        preferred_element_type=jnp.float32,
    )
    o_ref[...] = (acc + b_ref[...].astype(jnp.float32)).astype(o_ref.dtype)


def _proj_kernel_ktiled(x_ref, w_ref, b_ref, o_ref, acc_ref, *, compute_dtype):
    # Grid (vocab tiles, M tiles, K tiles) -- K innermost, "arbitrary".
    k = pl.program_id(2)

    @pl.when(k == 0)
    def _():
        acc_ref[...] = jnp.zeros_like(acc_ref)

    x = x_ref[...]
    w = w_ref[...]
    if compute_dtype is not None:
        x = x.astype(compute_dtype)
        w = w.astype(compute_dtype)
    acc_ref[...] += jax.lax.dot_general(
        x, w,
        dimension_numbers=(((1,), (1,)), ((), ())),
        preferred_element_type=jnp.float32,
    )

    @pl.when(k == pl.num_programs(2) - 1)
    def _():
        o_ref[...] = (acc_ref[...]
                      + b_ref[...].astype(jnp.float32)).astype(o_ref.dtype)


# --------------------------------------------------------------------------- #
# Generation-aware tiling
# --------------------------------------------------------------------------- #
def _vmem_capacity_bytes():
    try:
        info = pltpu.get_tpu_info()
        cap = getattr(info, "vmem_capacity_bytes", None)
        if cap:
            return int(cap)
    except Exception:
        pass
    try:
        kind = jax.devices()[0].device_kind.lower()
    except Exception:
        kind = ""
    if "v7" in kind or "tpu7" in kind:
        return 64 * 1024 * 1024
    if "v5" in kind or "v6" in kind:
        return 128 * 1024 * 1024
    return 64 * 1024 * 1024  # unknown -> conservative


def _generation_params():
    cap = _vmem_capacity_bytes()
    if cap >= 128 * 1024 * 1024:
        # v5e / v6e: 128 MiB physical per TensorCore -> big tiles, deeper
        # weight buffering to hide the slab DMA at vocab-tile boundaries.
        return dict(budget=88 << 20, limit_cap=112 << 20, weight_buffers=3)
    # v7x (64 MiB per TC) or unknown: stay conservative, default Buffered(2).
    return dict(budget=40 << 20, limit_cap=50 << 20, weight_buffers=2)


def _footprint(tm, tn, tk, D, x_bytes, w_bytes, out_bytes, w_bufs):
    fp = (2 * x_bytes * tm * tk          # x tile, double-buffered
          + w_bufs * w_bytes * tn * tk   # weight slab buffers
          + 2 * 4 * 8 * tn               # bias tile (sublane-padded), 2 bufs
          + 2 * out_bytes * tm * tn)     # output tile, double-buffered
    if tk < D:
        fp += 4 * tm * tn                # f32 accumulator scratch
    return fp


def _tm_candidates(M):
    if M <= 512:
        cands = [M]
        t = 256
        while t >= 8:
            if t < M:
                cands.append(t)
            t //= 2
        return cands
    return [512, 256, 128, 64, 32, 16, 8]


def _tn_candidates(V):
    if V <= 128:
        return [V]
    cands = [t for t in (4096, 2048, 1024, 512, 256, 128) if t <= V]
    if 128 < V <= 4096 and V % 128 == 0 and V not in cands:
        cands = [V] + [t for t in cands if t < V]
    return cands or [128]


def _tk_candidates(D):
    # Only used for the K-tiling fallback.  tk must divide D exactly so the
    # padded region of an edge block never leaks into the accumulation.
    return [t for t in (4096, 2048, 1024, 512, 256, 128) if t < D and D % t == 0]


def _pick_tiles(M, D, V, x_bytes, w_bytes, out_bytes, budget, w_bufs):
    """Return (tm, tn, tk).  tk == D means no K tiling."""
    tms = _tm_candidates(M)
    tns = _tn_candidates(V)

    def fits(tm, tn, tk):
        return _footprint(tm, tn, tk, D, x_bytes, w_bytes, out_bytes,
                          w_bufs) <= budget

    # 1) Prefer no K tiling, largest lane-dense tn first (x re-read traffic
    #    scales with V/tn), then the largest tm that still fits.
    for tn in tns:
        if tn < 512 and max(tns) >= 512:
            break  # tn would collapse; try K tiling instead
        for tm in tms:
            if fits(tm, tn, D):
                return tm, tn, D

    # 2) K-tiling fallback for very large d_model: keep tn >= 512 and add an
    #    "arbitrary" reduction axis with an f32 accumulator scratch.
    for tk in _tk_candidates(D):
        for tn in tns:
            for tm in tms:
                if fits(tm, tn, tk):
                    return tm, tn, tk

    # 3) Last resort: allow tn/tm below the preferred floors, no K tiling.
    for tn in tns:
        for tm in tms:
            if fits(tm, tn, D):
                return tm, tn, D
    return tms[-1], tns[-1], D


# --------------------------------------------------------------------------- #
# Wrapper
# --------------------------------------------------------------------------- #
def projection_layer(x, weight, bias, *, out_dtype=None, compute_dtype=None,
                     tm=None, tn=None):
    """out[..., v] = x[..., :] @ weight[v, :] + bias[v]   (PyTorch nn.Linear).

    weight: (vocab_size, d_model)  -- PyTorch layout, not transposed here.
    bias:   (vocab_size,)
    compute_dtype: optional (e.g. jnp.bfloat16) -- cast MXU operands inside
      the kernel; accumulation stays f32.  Default None keeps input dtypes.
    out_dtype: logits dtype (default x.dtype).
    """
    orig_shape = x.shape
    d_model = orig_shape[-1]
    vocab_size, wd = weight.shape
    assert wd == d_model and bias.shape == (vocab_size,)
    out_dtype = x.dtype if out_dtype is None else jnp.dtype(out_dtype)

    x2d = x.reshape(-1, d_model)
    M = x2d.shape[0]
    b2d = bias.reshape(1, vocab_size)

    params = _generation_params()
    w_bufs = params["weight_buffers"]
    x_bytes = x2d.dtype.itemsize
    w_bytes = weight.dtype.itemsize
    o_bytes = out_dtype.itemsize

    auto_tm, auto_tn, tk = _pick_tiles(M, d_model, vocab_size, x_bytes,
                                       w_bytes, o_bytes, params["budget"],
                                       w_bufs)
    tm = auto_tm if tm is None else max(1, min(tm, M))
    tn = auto_tn if tn is None else max(1, min(tn, vocab_size))

    n_j = pl.cdiv(vocab_size, tn)
    n_i = pl.cdiv(M, tm)
    n_k = 1 if tk >= d_model else d_model // tk

    est = _footprint(tm, tn, tk, d_model, x_bytes, w_bytes, o_bytes, w_bufs)
    vmem_limit = int(min(max(int(est * 1.2) + (4 << 20), 32 << 20),
                         params["limit_cap"]))

    def _run(weight_buffers):
        if tk >= d_model:
            grid = (n_j, n_i)
            x_spec = pl.BlockSpec((tm, d_model), lambda j, i: (i, 0))
            if weight_buffers > 2:
                w_spec = pl.BlockSpec((tn, d_model), lambda j, i: (j, 0),
                                      pipeline_mode=pl.Buffered(weight_buffers))
            else:
                w_spec = pl.BlockSpec((tn, d_model), lambda j, i: (j, 0))
            b_spec = pl.BlockSpec((1, tn), lambda j, i: (0, j))
            out_spec = pl.BlockSpec((tm, tn), lambda j, i: (i, j))
            kernel = functools.partial(_proj_kernel, compute_dtype=compute_dtype)
            scratch = ()
            dims = ("parallel", "arbitrary")
        else:
            grid = (n_j, n_i, n_k)
            x_spec = pl.BlockSpec((tm, tk), lambda j, i, k: (i, k))
            if weight_buffers > 2:
                w_spec = pl.BlockSpec((tn, tk), lambda j, i, k: (j, k),
                                      pipeline_mode=pl.Buffered(weight_buffers))
            else:
                w_spec = pl.BlockSpec((tn, tk), lambda j, i, k: (j, k))
            b_spec = pl.BlockSpec((1, tn), lambda j, i, k: (0, j))
            out_spec = pl.BlockSpec((tm, tn), lambda j, i, k: (i, j))
            kernel = functools.partial(_proj_kernel_ktiled,
                                       compute_dtype=compute_dtype)
            scratch = (pltpu.VMEM((tm, tn), jnp.float32),)
            dims = ("parallel", "arbitrary", "arbitrary")

        return pl.pallas_call(
            kernel,
            out_shape=jax.ShapeDtypeStruct((M, vocab_size), out_dtype),
            grid_spec=pltpu.PrefetchScalarGridSpec(
                num_scalar_prefetch=0,
                grid=grid,
                in_specs=[x_spec, w_spec, b_spec],
                out_specs=out_spec,
                scratch_shapes=scratch,
            ),
            compiler_params=pltpu.CompilerParams(
                dimension_semantics=dims,
                vmem_limit_bytes=vmem_limit,
            ),
        )(x2d, weight, b2d)

    try:
        out = _run(w_bufs)
    except Exception:
        if w_bufs == 2:
            raise
        # Fall back to default double-buffered weights if Buffered(3) is not
        # supported / does not fit on this JAX version or part.
        out = _run(2)

    return out.reshape(*orig_shape[:-1], vocab_size)


# --------------------------------------------------------------------------- #
# Demo / correctness check
# --------------------------------------------------------------------------- #
if __name__ == "__main__":
    # Small shapes consistent with the module's forward: (batch, seq, d_model).
    batch, seq, d_model, vocab_size = 2, 8, 32, 128

    key = jax.random.PRNGKey(0)
    kx, kw, kb = jax.random.split(key, 3)

    x = jax.random.normal(kx, (batch, seq, d_model), dtype=jnp.float32)
    # Deterministic synthetic parameters (same shapes as nn.Linear(d_model, V)).
    bound = 1.0 / math.sqrt(d_model)
    weight = jax.random.uniform(
        kw, (vocab_size, d_model), minval=-bound, maxval=bound, dtype=jnp.float32
    )
    bias = jax.random.uniform(
        kb, (vocab_size,), minval=-bound, maxval=bound, dtype=jnp.float32
    )

    out = projection_layer(x, weight, bias)
    out = jax.block_until_ready(out)

    # Cross-check against plain JAX reference.
    ref = x @ weight.T + bias
    assert out.shape == (batch, seq, vocab_size)
    assert jnp.allclose(out, ref, atol=1e-5, rtol=1e-5)

    print("KERNEL_OK")
</pallas_src>

<mosaic_0001>
module attributes {stable_mosaic.version = 11 : i64} {
  func.func @_proj_kernel(%arg0: i32, %arg1: i32, %arg2: memref<16x32xf32, #tpu.memory_space<vmem>>, %arg3: memref<128x32xf32, #tpu.memory_space<vmem>>, %arg4: memref<1x128xf32, #tpu.memory_space<vmem>>, %arg5: memref<16x128xf32, #tpu.memory_space<vmem>>) attributes {dimension_semantics = [#tpu.dimension_semantics<parallel>, #tpu.dimension_semantics<arbitrary>], iteration_bounds = array<i64: 1, 1>, scalar_prefetch = 0 : i64, scratch_operands = 0 : i64, tpu.core_type = #tpu.core_type<tc>, window_params = [{transform_indices = @transform_0, window_bounds = array<i64: 16, 32>}, {transform_indices = @transform_1, window_bounds = array<i64: 128, 32>}, {transform_indices = @transform_2, window_bounds = array<i64: 1, 128>}, {transform_indices = @transform_3, window_bounds = array<i64: 16, 128>}]} {
    %c0 = arith.constant 0 : index
    %c0_0 = arith.constant 0 : index
    %0 = vector.load %arg2[%c0, %c0_0] : memref<16x32xf32, #tpu.memory_space<vmem>>, vector<16x32xf32>
    %c0_1 = arith.constant 0 : index
    %c0_2 = arith.constant 0 : index
    %1 = vector.load %arg3[%c0_1, %c0_2] : memref<128x32xf32, #tpu.memory_space<vmem>>, vector<128x32xf32>
    %cst = arith.constant dense<0.000000e+00> : vector<16x128xf32>
    %2 = tpu.matmul %0, %1, %cst {dimension_numbers = #tpu.dot_dimension_numbers<[1], [1], [0], [0], [0, 0, 1, 0], [], []>} : vector<16x32xf32>, vector<128x32xf32>, vector<16x128xf32> -> vector<16x128xf32>
    %c0_3 = arith.constant 0 : index
    %c0_4 = arith.constant 0 : index
    %3 = vector.load %arg4[%c0_3, %c0_4] : memref<1x128xf32, #tpu.memory_space<vmem>>, vector<1x128xf32>
    %4 = vector.broadcast %3 : vector<1x128xf32> to vector<16x128xf32>
    %5 = arith.addf %2, %4 : vector<16x128xf32>
    %c0_5 = arith.constant 0 : index
    %c0_6 = arith.constant 0 : index
    %6 = vector.load %arg5[%c0_5, %c0_6] : memref<16x128xf32, #tpu.memory_space<vmem>>, vector<16x128xf32>
    tpu.vector_store %arg5[%c0_5, %c0_6], %5 {strides = array<i32>} : memref<16x128xf32, #tpu.memory_space<vmem>>, vector<16x128xf32>,
    return
  }
  func.func @transform_0(%arg0: i32, %arg1: i32) -> (i32, i32) {
    %c0_i32 = arith.constant 0 : i32
    %c0_i32_0 = arith.constant 0 : i32
    return %arg1, %c0_i32 : i32, i32
  }
  func.func @transform_1(%arg0: i32, %arg1: i32) -> (i32, i32) {
    %c0_i32 = arith.constant 0 : i32
    %c0_i32_0 = arith.constant 0 : i32
    return %arg0, %c0_i32 : i32, i32
  }
  func.func @transform_2(%arg0: i32, %arg1: i32) -> (i32, i32) {
    %c0_i32 = arith.constant 0 : i32
    %c0_i32_0 = arith.constant 0 : i32
    return %c0_i32, %arg0 : i32, i32
  }
  func.func @transform_3(%arg0: i32, %arg1: i32) -> (i32, i32) {
    %c0_i32 = arith.constant 0 : i32
    return %arg1, %arg0 : i32, i32
  }
}

</mosaic_0001>

<llo_original>
// kernel: tpu_custom_call.1
$region0: #{tpu_custom_call.1}
  #allocation0 [shape = 'u32[]', space=smem, size = 0x4, offset = 0x4, fixed_abs, tag = 'smem constant byte address 0x4 - core index']
  #allocation1 [shape = 'u32[144,128]{1,0:T(1,128)}', space=vmem, size = 0x12000, scoped, tag = 'internal scratch']
  %s0 = inlined_call_operand.vmem [shape: f32[16,32], index: 0, kind: input, shape index: {}]
  %s1 = inlined_call_operand.vmem [shape: f32[128,32], index: 1, kind: input, shape index: {}]
  %s2 = inlined_call_operand.vmem [shape: f32[1,128], index: 2, kind: input, shape index: {}]
  %s3 = inlined_call_operand.hbm [shape: f32[16,128], index: 3, kind: output, shape index: {}]
  %s4 = sld [smem:[#allocation0]]
  $region22: #{tpu_custom_call.1} parent=0
    _
  %s6 = ssub.s32 1, %s4
  %s7 = scalar_select 0, %s6, %s4
  $region1: #{tpu_custom_call.1} parent=0
    #allocation2 [shape = 'u8[8192]{0}', space=vmem, size = 0x2000, scoped, tag = 'output window, operand 0, single buffered']
    #allocation3 [shape = 's32[1]{0}', space=sflag, size = 0x4, scoped, tag = 'scoped memory for tpu_custom_call.1']
    %8 = vsyncpa [#allocation3], 0
    // Predicated region
    $region2: #{tpu_custom_call.1} parent=1 // pred_check
      _
    $region3: #{tpu_custom_call.1} parent=1 // pred_check_branch
      %10 = sbr.rel (0) target = $region5
    $region4: #{tpu_custom_call.1} parent=1 // pred_region
      _
    $region5: #{tpu_custom_call.1} parent=1 // pred_fallthru
      _
    // Predicated region
    $region6: #{tpu_custom_call.1} parent=1 // pred_check
      _
    $region7: #{tpu_custom_call.1} parent=1 // pred_check_branch
      %12 = sbr.rel (0) target = $region9
    $region8: #{tpu_custom_call.1} parent=1 // pred_region
      _
    $region9: #{tpu_custom_call.1} parent=1 // pred_fallthru
      _
    // Predicated region
    $region10: #{tpu_custom_call.1} parent=1 // pred_check
      _
    $region11: #{tpu_custom_call.1} parent=1 // pred_check_branch
      %14 = sbr.rel (0) target = $region13
    $region12: #{tpu_custom_call.1} parent=1 // pred_region
      _
    $region13: #{tpu_custom_call.1} parent=1 // pred_fallthru
      _
    %v15 = vld [vmem:[%s0] sm:$0xff]
    %v16 = vld [vmem:[%s0 + $0x8] sm:$0xff]
    %v17 = vld [vmem:[%s1] sm:$0xff]
    %v18 = vld [vmem:[%s1 + $0x8] sm:$0xff]
    %v19 = vld [vmem:[%s1 + $0x10] sm:$0xff]
    %v20 = vld [vmem:[%s1 + $0x18] sm:$0xff]
    %v21 = vld [vmem:[%s1 + $0x20] sm:$0xff]
    %v22 = vld [vmem:[%s1 + $0x28] sm:$0xff]
    %v23 = vld [vmem:[%s1 + $0x30] sm:$0xff]
    %v24 = vld [vmem:[%s1 + $0x38] sm:$0xff]
    %v25 = vld [vmem:[%s1 + $0x40] sm:$0xff]
    %v26 = vld [vmem:[%s1 + $0x48] sm:$0xff]
    %v27 = vld [vmem:[%s1 + $0x50] sm:$0xff]
    %v28 = vld [vmem:[%s1 + $0x58] sm:$0xff]
    %v29 = vld [vmem:[%s1 + $0x60] sm:$0xff]
    %v30 = vld [vmem:[%s1 + $0x68] sm:$0xff]
    %v31 = vld [vmem:[%s1 + $0x70] sm:$0xff]
    %v32 = vld [vmem:[%s1 + $0x78] sm:$0xff]
    %v33 = vld [vmem:[%s2] sm:$0x1]
    %v35 = vlaneseq
    %v36 = vshrl.u32 %v35, 7
    %v37 = vsub.s32 0, %v36
    %v38 = vrot.slane %v33, %v37
    %vm40 = vcmask 261120
    %v42 = vsel %vm40, %v15, 0
    %v45 = vsel %vm40, %v16, 0
    %v48 = vsel %vm40, %v17, 0
    %v51 = vsel %vm40, %v18, 0
    %v54 = vsel %vm40, %v19, 0
    %v57 = vsel %vm40, %v20, 0
    %v60 = vsel %vm40, %v21, 0
    %v63 = vsel %vm40, %v22, 0
    %v66 = vsel %vm40, %v23, 0
    %v69 = vsel %vm40, %v24, 0
    %v72 = vsel %vm40, %v25, 0
    %v75 = vsel %vm40, %v26, 0
    %v78 = vsel %vm40, %v27, 0
    %v81 = vsel %vm40, %v28, 0
    %v84 = vsel %vm40, %v29, 0
    %v87 = vsel %vm40, %v30, 0
    %v90 = vsel %vm40, %v31, 0
    %v93 = vsel %vm40, %v32, 0
    %95 = vmatprep.subr.mxu0 0.0
    %96 = vmatpush1.xpose.msra.mxu0 %v93
    %97 = vmatprep.subr.mxu0 0.0
    %98 = vmatpush1.xpose.msra.mxu0 %v90
    %99 = vmatprep.subr.mxu0 0.0
    %100 = vmatpush1.xpose.msra.mxu0 %v87
    %101 = vmatprep.subr.mxu0 0.0
    %102 = vmatpush1.xpose.msra.mxu0 %v84
    %103 = vmatprep.subr.mxu0 0.0
    %104 = vmatpush1.xpose.msra.mxu0 %v81
    %105 = vmatprep.subr.mxu0 0.0
    %106 = vmatpush1.xpose.msra.mxu0 %v78
    %107 = vmatprep.subr.mxu0 0.0
    %108 = vmatpush1.xpose.msra.mxu0 %v75
    %109 = vmatprep.subr.mxu0 0.0
    %110 = vmatpush1.xpose.msra.mxu0 %v72
    %111 = vmatprep.subr.mxu0 0.0
    %112 = vmatpush1.xpose.msra.mxu0 %v69
    %113 = vmatprep.subr.mxu0 0.0
    %114 = vmatpush1.xpose.msra.mxu0 %v66
    %115 = vmatprep.subr.mxu0 0.0
    %116 = vmatpush1.xpose.msra.mxu0 %v63
    %117 = vmatprep.subr.mxu0 0.0
    %118 = vmatpush1.xpose.msra.mxu0 %v60
    %119 = vmatprep.subr.mxu0 0.0
    %120 = vmatpush1.xpose.msra.mxu0 %v57
    %121 = vmatprep.subr.mxu0 0.0
    %122 = vmatpush1.xpose.msra.mxu0 %v54
    %123 = vmatprep.subr.mxu0 0.0
    %124 = vmatpush1.xpose.msra.mxu0 %v51
    %125 = vmatprep.subr.mxu0 0.0
    %126 = vmatpush1.xpose.msra.mxu0 %v48
    %127 = vmatprep.subr.mxu0 0.0
    %128 = vmatpush2.xpose.msra.mxu0 0.0
    %129 = vmatprep.subr.mxu0 0.0
    %130 = vmatpush2.xpose.msra.mxu0 0.0
    %131 = vmatprep.subr.mxu0 0.0
    %132 = vmatpush2.xpose.msra.mxu0 0.0
    %133 = vmatprep.subr.mxu0 0.0
    %134 = vmatpush2.xpose.msra.mxu0 0.0
    %135 = vmatprep.subr.mxu0 0.0
    %136 = vmatpush2.xpose.msra.mxu0 0.0
    %137 = vmatprep.subr.mxu0 0.0
    %138 = vmatpush2.xpose.msra.mxu0 0.0
    %139 = vmatprep.subr.mxu0 0.0
    %140 = vmatpush2.xpose.msra.mxu0 0.0
    %141 = vmatprep.subr.mxu0 0.0
    %142 = vmatpush2.xpose.msra.mxu0 0.0
    %143 = vmatprep.subr.mxu0 0.0
    %144 = vmatpush2.xpose.msra.mxu0 0.0
    %145 = vmatprep.subr.mxu0 0.0
    %146 = vmatpush2.xpose.msra.mxu0 0.0
    %147 = vmatprep.subr.mxu0 0.0
    %148 = vmatpush2.xpose.msra.mxu0 0.0
    %149 = vmatprep.subr.mxu0 0.0
    %150 = vmatpush2.xpose.msra.mxu0 0.0
    %151 = vmatprep.subr.mxu0 0.0
    %152 = vmatpush2.xpose.msra.mxu0 0.0
    %153 = vmatprep.subr.mxu0 0.0
    %154 = vmatpush2.xpose.msra.mxu0 0.0
    %155 = vmatprep.subr.mxu0 0.0
    %156 = vmatpush2.xpose.msra.mxu0 0.0
    %157 = vmatprep.subr.mxu0 0.0
    %158 = vmatpush2.xpose.msra.mxu0 0.0
    %159 = vmatprep.mubr.f32.mxu0 0.0
    %160 = vmatmul.mubr.f32.gmra.mxu0 %v42
    %v161 = vpop.f32.mrf.mxu0
    %v162 = vadd.f32 %v38, %v161
    %v163 = vpop.f32.mrf.mxu0
    %164 = vmatprep.mubr.f32.mxu0 0.0
    %165 = vmatmul.mubr.f32.gmra.mxu0 %v45
    %v166 = vpop.f32.mrf.mxu0
    %v167 = vadd.f32 %v38, %v166
    %v168 = vpop.f32.mrf.mxu0
    %169 = vdwg.mxu0
    %170 = vst [vmem:[#allocation2] sm:$0xff] %v162
    %171 = vst [vmem:[#allocation2 + $0x8] sm:$0xff] %v167
    // Predicated region
    $region14: #{tpu_custom_call.1} parent=1 // pred_check
      _
    $region15: #{tpu_custom_call.1} parent=1 // pred_check_branch
      %173 = sbr.rel (0) target = $region17
    $region16: #{tpu_custom_call.1} parent=1 // pred_region
      %s175 = ssub.s32 256, 256
      %176 = vsyncadd [#allocation3], %s175
      %s177 = sshll.u32 [#allocation2], 4
      %s178 = int_to_ptr.vmem [resolvable:$true] %s177
      %183 = dma.vmem_to_hbm [thread:$0]  %s178, 256, %s3, [#allocation3], 128, 128, 8
    $region17: #{tpu_custom_call.1} parent=1 // pred_fallthru
      _
    // Predicated region
    $region18: #{tpu_custom_call.1} parent=1 // pred_check
      _
    $region19: #{tpu_custom_call.1} parent=1 // pred_check_branch
      %185 = sbr.rel (0) target = $region21
    $region20: #{tpu_custom_call.1} parent=1 // pred_region
      %186 = dma.done [#allocation3], 256
    $region21: #{tpu_custom_call.1} parent=1 // pred_fallthru
      _
    %187 = vsyncpa [#allocation3], 1

</llo_original>
